<compile_context>
chip_gen: v7x
topology: tpu7x:2x2x1
jax: 0.10.0
libtpu: 0.0.40
codegen_flags: <defaults>
</compile_context>

<pallas_src>
import math

import jax
import jax.numpy as jnp
from jax.experimental import pallas as pl
from jax.experimental.pallas import tpu as pltpu


def _spectral_embed_kernel(x_ref, w_ref, b_ref, o_ref):
    """x_ref: (R, 2)   w_ref: (2, Npad)   b_ref: (1, Npad)   o_ref: (R, Npad).

    Two VPU broadcast FMAs + bias + EUP tanh.  All compute in f32.
    """
    x = x_ref[...].astype(jnp.float32)          # (R, 2)
    w = w_ref[...].astype(jnp.float32)          # (2, Npad)
    b = b_ref[...].astype(jnp.float32)          # (1, Npad)
    y = x[:, 0:1] * w[0:1, :] + x[:, 1:2] * w[1:2, :] + b   # (R, Npad), VALU only
    o_ref[...] = jnp.tanh(y).astype(o_ref.dtype)             # EUP tanh, lane-dense store


def prepare_params(weight, bias):
    """One-time nn.Linear(2, N) -> kernel-layout conversion (done at load time).

    Returns (w_t, b_row, n_filters) where w_t is (2, Npad) and b_row is
    (1, Npad), zero-padded so Npad is a multiple of 128 (lane-dense stores).
    """
    n_filters = weight.shape[0]
    n_pad = max(128, pl.cdiv(n_filters, 128) * 128)
    w_t = jnp.zeros((2, n_pad), jnp.float32).at[:, :n_filters].set(
        jnp.asarray(weight, jnp.float32).T)
    b_row = jnp.zeros((1, n_pad), jnp.float32).at[:, :n_filters].set(
        jnp.asarray(bias, jnp.float32))
    return w_t, b_row, n_filters


def spectral_embed_forward(x, w_t, b_row, n_filters, *, out_dtype=None):
    """SpectralEmbed.forward (eval mode).

    x:         (B, S, 2)
    w_t:       (2, Npad)  pre-transposed, lane-padded weight (prepare_params)
    b_row:     (1, Npad)  lane-padded bias row              (prepare_params)
    n_filters: true (unpadded) output width
    out_dtype: optional store dtype (e.g. jnp.bfloat16 to halve HBM writes on
               v6e/v7x); compute stays f32 regardless.
    """
    B, S, C = x.shape
    assert C == 2, "SpectralEmbed expects 2 input channels per band"
    n_pad = w_t.shape[1]
    out_dtype = x.dtype if out_dtype is None else out_dtype

    rows = B * S
    x2 = x.reshape(rows, C)                     # metadata-only reshape in XLA

    bytes_accessed = (
        x2.size * jnp.dtype(x2.dtype).itemsize
        + w_t.size * jnp.dtype(w_t.dtype).itemsize
        + b_row.size * jnp.dtype(b_row.dtype).itemsize
        + rows * n_pad * jnp.dtype(out_dtype).itemsize
    )
    cost = pl.CostEstimate(
        flops=4 * rows * n_pad,                 # 2 muls + 2 adds per output elem
        transcendentals=rows * n_pad,           # tanh
        bytes_accessed=bytes_accessed,
    )
    out_shape = jax.ShapeDtypeStruct((rows, n_pad), out_dtype)

    # Pick a row tile for the streaming (large B*S) path.  512+ rows puts us at
    # ~85% of HBM roofline; smaller/odd row counts take the un-gridded path.
    tile_rows = next((t for t in (2048, 1024, 512, 256, 128) if rows % t == 0), None)

    if tile_rows is None:
        # Tiny problem: single invocation, whole arrays resident in VMEM.
        vmem = pl.BlockSpec(memory_space=pltpu.MemorySpace.VMEM)
        out2 = pl.pallas_call(
            _spectral_embed_kernel,
            out_shape=out_shape,
            in_specs=[vmem, vmem, vmem],
            out_specs=vmem,
            cost_estimate=cost,
        )(x2, w_t, b_row)
    else:
        # Streaming path: 1-D grid over rows.  VMEM per buffer at the largest
        # tile (2048 x 128 f32 = 1 MiB, double-buffered) fits v7x's 64 MiB
        # (32 MiB scoped) budget with plenty of headroom.
        out2 = pl.pallas_call(
            _spectral_embed_kernel,
            out_shape=out_shape,
            grid=(rows // tile_rows,),
            in_specs=[
                pl.BlockSpec((tile_rows, C), lambda i: (i, 0)),
                pl.BlockSpec((C, n_pad), lambda i: (0, 0)),
                pl.BlockSpec((1, n_pad), lambda i: (0, 0)),
            ],
            out_specs=pl.BlockSpec((tile_rows, n_pad), lambda i: (i, 0)),
            compiler_params=pltpu.CompilerParams(
                dimension_semantics=("parallel",),   # shards across both v7x TCs
            ),
            cost_estimate=cost,
        )(x2, w_t, b_row)

    if n_pad != n_filters:
        out2 = out2[:, :n_filters]              # drop lane padding (wrapper side)
    return out2.reshape(B, S, n_filters)        # metadata-only reshape in XLA


def _reference_forward(x, weight, bias):
    """Pure-JAX reference mirroring nn.Linear(2, N) + Tanh (PyTorch layout)."""
    return jnp.tanh(x @ weight.T + bias)


if __name__ == "__main__":
    B, S, N = 2, 8, 64     # batch, seq (spectral bands), n_filters

    root = jax.random.PRNGKey(0)
    k_x, k_w, k_b = jax.random.split(root, 3)

    x = jax.random.normal(k_x, (B, S, 2), dtype=jnp.float32)

    # Deterministic synthetic parameters with nn.Linear(2, N) shapes/scale.
    bound = 1.0 / math.sqrt(2.0)
    weight = jax.random.uniform(k_w, (N, 2), jnp.float32, -bound, bound)
    bias = jax.random.uniform(k_b, (N,), jnp.float32, -bound, bound)

    # One-time kernel-layout parameter prep (transpose + lane-pad to 128).
    w_t, b_row, n_filters = prepare_params(weight, bias)

    out = spectral_embed_forward(x, w_t, b_row, n_filters)
    out = jax.block_until_ready(out)

    ref = _reference_forward(x, weight, bias)
    assert out.shape == (B, S, N)
    assert jnp.allclose(out, ref, atol=1e-4, rtol=1e-4), "mismatch vs reference"

    print("KERNEL_OK")
</pallas_src>

<mosaic_0001>
module attributes {stable_mosaic.version = 11 : i64} {
  func.func @_spectral_embed_kernel(%arg0: memref<16x2xf32, #tpu.memory_space<vmem>>, %arg1: memref<2x128xf32, #tpu.memory_space<vmem>>, %arg2: memref<1x128xf32, #tpu.memory_space<vmem>>, %arg3: memref<16x128xf32, #tpu.memory_space<vmem>>) attributes {dimension_semantics = [], scalar_prefetch = 0 : i64, scratch_operands = 0 : i64, tpu.core_type = #tpu.core_type<tc>} {
    %c0 = arith.constant 0 : index
    %c0_0 = arith.constant 0 : index
    %0 = vector.load %arg0[%c0, %c0_0] : memref<16x2xf32, #tpu.memory_space<vmem>>, vector<16x2xf32>
    %c0_1 = arith.constant 0 : index
    %c0_2 = arith.constant 0 : index
    %1 = vector.load %arg1[%c0_1, %c0_2] : memref<2x128xf32, #tpu.memory_space<vmem>>, vector<2x128xf32>
    %c0_3 = arith.constant 0 : index
    %c0_4 = arith.constant 0 : index
    %2 = vector.load %arg2[%c0_3, %c0_4] : memref<1x128xf32, #tpu.memory_space<vmem>>, vector<1x128xf32>
    %3 = vector.extract_strided_slice %0 {offsets = [0, 0], sizes = [16, 1], strides = [1, 1]} : vector<16x2xf32> to vector<16x1xf32>
    %4 = vector.extract_strided_slice %1 {offsets = [0, 0], sizes = [1, 128], strides = [1, 1]} : vector<2x128xf32> to vector<1x128xf32>
    %5 = vector.broadcast %3 : vector<16x1xf32> to vector<16x128xf32>
    %6 = vector.broadcast %4 : vector<1x128xf32> to vector<16x128xf32>
    %7 = arith.mulf %5, %6 : vector<16x128xf32>
    %8 = vector.extract_strided_slice %0 {offsets = [0, 1], sizes = [16, 1], strides = [1, 1]} : vector<16x2xf32> to vector<16x1xf32>
    %9 = vector.extract_strided_slice %1 {offsets = [1, 0], sizes = [1, 128], strides = [1, 1]} : vector<2x128xf32> to vector<1x128xf32>
    %10 = vector.broadcast %8 : vector<16x1xf32> to vector<16x128xf32>
    %11 = vector.broadcast %9 : vector<1x128xf32> to vector<16x128xf32>
    %12 = arith.mulf %10, %11 : vector<16x128xf32>
    %13 = arith.addf %7, %12 : vector<16x128xf32>
    %14 = vector.broadcast %2 : vector<1x128xf32> to vector<16x128xf32>
    %15 = arith.addf %13, %14 : vector<16x128xf32>
    %16 = math.tanh %15 : vector<16x128xf32>
    %c0_5 = arith.constant 0 : index
    %c0_6 = arith.constant 0 : index
    %17 = vector.load %arg3[%c0_5, %c0_6] : memref<16x128xf32, #tpu.memory_space<vmem>>, vector<16x128xf32>
    tpu.vector_store %arg3[%c0_5, %c0_6], %16 {strides = array<i32>} : memref<16x128xf32, #tpu.memory_space<vmem>>, vector<16x128xf32>,
    return
  }
}

</mosaic_0001>

<llo_original>
// kernel: tpu_custom_call.1
$region0: #{tpu_custom_call.1}
  #allocation0 [shape = 'u32[]', space=smem, size = 0x4, offset = 0x4, fixed_abs, tag = 'smem constant byte address 0x4 - core index']
  #allocation1 [shape = 'u32[144,128]{1,0:T(1,128)}', space=vmem, size = 0x12000, scoped, tag = 'internal scratch']
  %s0 = inlined_call_operand.vmem [shape: f32[16,2], index: 0, kind: input, shape index: {}]
  %s1 = inlined_call_operand.vmem [shape: f32[2,128], index: 1, kind: input, shape index: {}]
  %s2 = inlined_call_operand.vmem [shape: f32[1,128], index: 2, kind: input, shape index: {}]
  %s3 = inlined_call_operand.hbm [shape: f32[16,128], index: 3, kind: output, shape index: {}]
  %s4 = sld [smem:[#allocation0]]
  $region22: #{tpu_custom_call.1} parent=0
    _
  %s6 = ssub.s32 1, %s4
  %s7 = scalar_select 0, %s6, %s4
  $region1: #{tpu_custom_call.1} parent=0
    #allocation2 [shape = 'u8[8192]{0}', space=vmem, size = 0x2000, scoped, tag = 'output window, operand 0, single buffered']
    #allocation3 [shape = 's32[1]{0}', space=sflag, size = 0x4, scoped, tag = 'scoped memory for tpu_custom_call.1']
    %8 = vsyncpa [#allocation3], 0
    // Predicated region
    $region2: #{tpu_custom_call.1} parent=1 // pred_check
      _
    $region3: #{tpu_custom_call.1} parent=1 // pred_check_branch
      %10 = sbr.rel (0) target = $region5
    $region4: #{tpu_custom_call.1} parent=1 // pred_region
      _
    $region5: #{tpu_custom_call.1} parent=1 // pred_fallthru
      _
    // Predicated region
    $region6: #{tpu_custom_call.1} parent=1 // pred_check
      _
    $region7: #{tpu_custom_call.1} parent=1 // pred_check_branch
      %12 = sbr.rel (0) target = $region9
    $region8: #{tpu_custom_call.1} parent=1 // pred_region
      _
    $region9: #{tpu_custom_call.1} parent=1 // pred_fallthru
      _
    // Predicated region
    $region10: #{tpu_custom_call.1} parent=1 // pred_check
      _
    $region11: #{tpu_custom_call.1} parent=1 // pred_check_branch
      %14 = sbr.rel (0) target = $region13
    $region12: #{tpu_custom_call.1} parent=1 // pred_region
      _
    $region13: #{tpu_custom_call.1} parent=1 // pred_fallthru
      _
    %v15 = vld [vmem:[%s0] sm:$0xff]
    %v16 = vld [vmem:[%s0 + $0x8] sm:$0xff]
    %v17 = vld [vmem:[%s1] sm:$0x3]
    %v18 = vld [vmem:[%s2] sm:$0x1]
    %20 = vset.pattern.permute.xlu0 0
    %21 = vperm.xlu0 %20, %v15
    %v22 = vpop.permute.xlu0 %21
    %25 = vset.pattern.permute.xlu0 0
    %26 = vperm.xlu0 %25, %v16
    %v27 = vpop.permute.xlu0 %26
    %v29 = vlaneseq
    %v30 = vshrl.u32 %v29, 7
    %v31 = vsub.s32 0, %v30
    %v32 = vrot.slane %v17, %v31
    %v33 = vmul.f32 %v22, %v32
    %v34 = vmul.f32 %v27, %v32
    %35 = vset.pattern.permute.xlu0 1
    %36 = vperm.xlu0 %35, %v15
    %v37 = vpop.permute.xlu0 %36
    %39 = vset.pattern.permute.xlu0 1
    %40 = vperm.xlu0 %39, %v16
    %v41 = vpop.permute.xlu0 %40
    %v43 = vlaneseq
    %v44 = vshrl.u32 %v43, 7
    %v45 = vsub.s32 1, %v44
    %v46 = vrot.slane %v17, %v45
    %v47 = vmul.f32 %v37, %v46
    %v48 = vmul.f32 %v41, %v46
    %v49 = vadd.f32 %v33, %v47
    %v50 = vadd.f32 %v34, %v48
    %v52 = vlaneseq
    %v53 = vshrl.u32 %v52, 7
    %v54 = vsub.s32 0, %v53
    %v55 = vrot.slane %v18, %v54
    %v57 = vadd.f32 %v49, %v55
    %v58 = vadd.f32 %v50, %v55
    %v59 = vtanh.pop %v57
    %v60 = vtanh.pop %v58
    %61 = vst [vmem:[#allocation2] sm:$0xff] %v59
    %62 = vst [vmem:[#allocation2 + $0x8] sm:$0xff] %v60
    // Predicated region
    $region14: #{tpu_custom_call.1} parent=1 // pred_check
      _
    $region15: #{tpu_custom_call.1} parent=1 // pred_check_branch
      %64 = sbr.rel (0) target = $region17
    $region16: #{tpu_custom_call.1} parent=1 // pred_region
      %s66 = ssub.s32 256, 256
      %67 = vsyncadd [#allocation3], %s66
      %s68 = sshll.u32 [#allocation2], 4
      %s69 = int_to_ptr.vmem [resolvable:$true] %s68
      %74 = dma.vmem_to_hbm [thread:$0]  %s69, 256, %s3, [#allocation3], 128, 128, 8
    $region17: #{tpu_custom_call.1} parent=1 // pred_fallthru
      _
    // Predicated region
    $region18: #{tpu_custom_call.1} parent=1 // pred_check
      _
    $region19: #{tpu_custom_call.1} parent=1 // pred_check_branch
      %76 = sbr.rel (0) target = $region21
    $region20: #{tpu_custom_call.1} parent=1 // pred_region
      %77 = dma.done [#allocation3], 256
    $region21: #{tpu_custom_call.1} parent=1 // pred_fallthru
      _
    %78 = vsyncpa [#allocation3], 1

</llo_original>
